<compile_context>
chip_gen: v5e
topology: v5e:2x2
jax: 0.10.0
libtpu: 0.0.40
codegen_flags: <defaults>
</compile_context>

<pallas_src>
import jax
import jax.numpy as jnp
from jax.experimental import pallas as pl
from jax.experimental.pallas import tpu as pltpu


def gru_kernel(x_ref, wi_ref, bi_ref, wh_ref, bh_ref, wlin_ref, blin_ref,
               out_ref, gx_ref, hseq_ref):
    S, Bp, D = x_ref.shape
    H = wh_ref.shape[0]
    H3 = wh_ref.shape[1]
    O = wlin_ref.shape[1]

    # ---- Phase 1: time-parallel input projection (one big MXU matmul). ----
    x2d = x_ref[...].reshape(S * Bp, D)
    gx = jnp.dot(x2d, wi_ref[...], preferred_element_type=jnp.float32) + bi_ref[...]
    gx_ref[...] = gx.reshape(S, Bp, H3)

    # Hoist loop-invariant weights / biases out of the recurrence.
    wh = wh_ref[...]      # (H, 3H)
    bh = bh_ref[...]      # (1, 3H): zeros for r,z columns, b_hn for n columns

    # ---- Phase 2: sequential recurrence (one matmul + elementwise / step). --
    # S is small and static here, so the loop is unrolled at trace time
    # (equivalent to lax.fori_loop(..., unroll=True)); switch to fori_loop for
    # long sequences to bound compile time.
    h = jnp.zeros((Bp, H), jnp.float32)
    for t in range(S):
        gx_t = gx_ref[t]                                               # (Bp, 3H)
        gh = jnp.dot(h, wh, preferred_element_type=jnp.float32) + bh   # (Bp, 3H)
        rz = jax.nn.sigmoid(gx_t[:, :2 * H] + gh[:, :2 * H])
        r = rz[:, :H]
        z = rz[:, H:]
        n = jnp.tanh(gx_t[:, 2 * H:] + r * gh[:, 2 * H:])
        h = n + z * (h - n)
        hseq_ref[t] = h

    # ---- Phase 3: time-parallel output projection, single writeback. -------
    hs = hseq_ref[...].reshape(S * Bp, H)
    y = jnp.dot(hs, wlin_ref[...], preferred_element_type=jnp.float32) + blin_ref[...]
    out_ref[...] = y.reshape(S, Bp, O).astype(out_ref.dtype)


def gru_model_forward(x, params):
    """x: (S, B, D) float32 -> (S, B, O) float32."""
    S, B, D = x.shape
    H = params["wh"].shape[0]
    O = params["wlin"].shape[1]

    # Pad batch up to a sublane multiple (8) so the recurrent matmul and
    # stores use full vregs; padded rows are computed on and discarded.
    Bp = ((B + 7) // 8) * 8
    if Bp != B:
        x = jnp.pad(x, ((0, 0), (0, Bp - B), (0, 0)))

    vmem_spec = pl.BlockSpec(memory_space=pltpu.MemorySpace.VMEM)

    out = pl.pallas_call(
        gru_kernel,
        out_shape=jax.ShapeDtypeStruct((S, Bp, O), jnp.float32),
        in_specs=[vmem_spec] * 7,
        out_specs=vmem_spec,
        scratch_shapes=[
            pltpu.VMEM((S, Bp, 3 * H), jnp.float32),   # precomputed input gates
            pltpu.VMEM((S, Bp, H), jnp.float32),       # hidden-state sequence
        ],
    )(x, params["wi"], params["bi"], params["wh"], params["bh"],
      params["wlin"], params["blin"])

    return out[:, :B, :]


def init_params(key, input_dim, hidden_dim, output_dim):
    """Deterministic PyTorch-style init: U(-1/sqrt(H), 1/sqrt(H)).

    Returns (packed, raw):
      packed -- fused layout consumed by the kernel.
      raw    -- PyTorch-layout tensors used by the pure-JAX reference.
    """
    H, D, O = hidden_dim, input_dim, output_dim
    k = 1.0 / jnp.sqrt(jnp.float32(H))
    keys = jax.random.split(key, 6)
    # PyTorch layout: weight_ih_l0 (3H, D), weight_hh_l0 (3H, H); gate order r,z,n.
    w_ih = jax.random.uniform(keys[0], (3 * H, D), jnp.float32, -k, k)
    w_hh = jax.random.uniform(keys[1], (3 * H, H), jnp.float32, -k, k)
    b_ih = jax.random.uniform(keys[2], (3 * H,), jnp.float32, -k, k)
    b_hh = jax.random.uniform(keys[3], (3 * H,), jnp.float32, -k, k)
    w_lin = jax.random.uniform(keys[4], (O, H), jnp.float32, -k, k)
    b_lin = jax.random.uniform(keys[5], (O,), jnp.float32, -k, k)

    raw = {"w_ih": w_ih, "w_hh": w_hh, "b_ih": b_ih, "b_hh": b_hh,
           "w_lin": w_lin, "b_lin": b_lin}

    # Fused kernel layout (gate order r, z, n along the 3H axis).
    b_i = jnp.concatenate([b_ih[0:H] + b_hh[0:H],            # r: pre-summed
                           b_ih[H:2 * H] + b_hh[H:2 * H],    # z: pre-summed
                           b_ih[2 * H:3 * H]])               # n: input side only
    b_h = jnp.concatenate([jnp.zeros(2 * H, jnp.float32),
                           b_hh[2 * H:3 * H]])               # n: hidden side (inside r*(...))
    packed = {
        "wi": w_ih.T,                    # (D, 3H)  -> x @ wi
        "wh": w_hh.T,                    # (H, 3H)  -> h @ wh
        "bi": b_i.reshape(1, 3 * H),
        "bh": b_h.reshape(1, 3 * H),
        "wlin": w_lin.T,                 # (H, O)
        "blin": b_lin.reshape(1, O),
    }
    return packed, raw


def gru_model_reference(x, raw, hidden_dim):
    """Pure-JAX reference written directly from the PyTorch nn.GRU equations."""
    H = hidden_dim
    w_ih, w_hh, b_ih, b_hh = raw["w_ih"], raw["w_hh"], raw["b_ih"], raw["b_hh"]
    w_ir, w_iz, w_in = w_ih[:H], w_ih[H:2 * H], w_ih[2 * H:]
    w_hr, w_hz, w_hn = w_hh[:H], w_hh[H:2 * H], w_hh[2 * H:]
    b_ir, b_iz, b_in = b_ih[:H], b_ih[H:2 * H], b_ih[2 * H:]
    b_hr, b_hz, b_hn = b_hh[:H], b_hh[H:2 * H], b_hh[2 * H:]

    def step(h, x_t):
        r = jax.nn.sigmoid(x_t @ w_ir.T + b_ir + h @ w_hr.T + b_hr)
        z = jax.nn.sigmoid(x_t @ w_iz.T + b_iz + h @ w_hz.T + b_hz)
        n = jnp.tanh(x_t @ w_in.T + b_in + r * (h @ w_hn.T + b_hn))
        h_new = (1.0 - z) * n + z * h
        y = h_new @ raw["w_lin"].T + raw["b_lin"]
        return h_new, y

    B = x.shape[1]
    h0 = jnp.zeros((B, H), jnp.float32)
    _, ys = jax.lax.scan(step, h0, x)
    return ys


if __name__ == "__main__":
    # Small shapes: seq=8, batch=2, input_dim=8, hidden_dim=32, output_dim=4
    S, B, D, H, O = 8, 2, 8, 32, 4

    key = jax.random.PRNGKey(0)
    k_x, k_p = jax.random.split(key)
    x = jax.random.normal(k_x, (S, B, D), jnp.float32)
    packed, raw = init_params(k_p, D, H, O)

    out = gru_model_forward(x, packed)
    out = jax.block_until_ready(out)

    ref = gru_model_reference(x, raw, H)
    assert out.shape == (S, B, O), out.shape
    assert jnp.allclose(out, ref, atol=1e-5, rtol=1e-5), (
        float(jnp.max(jnp.abs(out - ref))))

    print("KERNEL_OK")
</pallas_src>

<mosaic_0001>
module attributes {stable_mosaic.version = 11 : i64} {
  func.func @gru_kernel(%arg0: memref<8x8x8xf32, #tpu.memory_space<vmem>>, %arg1: memref<8x96xf32, #tpu.memory_space<vmem>>, %arg2: memref<1x96xf32, #tpu.memory_space<vmem>>, %arg3: memref<32x96xf32, #tpu.memory_space<vmem>>, %arg4: memref<1x96xf32, #tpu.memory_space<vmem>>, %arg5: memref<32x4xf32, #tpu.memory_space<vmem>>, %arg6: memref<1x4xf32, #tpu.memory_space<vmem>>, %arg7: memref<8x8x4xf32, #tpu.memory_space<vmem>>, %arg8: memref<8x8x96xf32, #tpu.memory_space<vmem>>, %arg9: memref<8x8x32xf32, #tpu.memory_space<vmem>>) attributes {dimension_semantics = [], scalar_prefetch = 0 : i64, scratch_operands = 2 : i64, tpu.core_type = #tpu.core_type<tc>} {
    %c0 = arith.constant 0 : index
    %c0_0 = arith.constant 0 : index
    %c0_1 = arith.constant 0 : index
    %0 = vector.load %arg0[%c0, %c0_0, %c0_1] : memref<8x8x8xf32, #tpu.memory_space<vmem>>, vector<8x8x8xf32>
    %1 = vector.shape_cast %0 : vector<8x8x8xf32> to vector<64x8xf32>
    %c0_2 = arith.constant 0 : index
    %c0_3 = arith.constant 0 : index
    %2 = vector.load %arg1[%c0_2, %c0_3] : memref<8x96xf32, #tpu.memory_space<vmem>>, vector<8x96xf32>
    %cst = arith.constant dense<0.000000e+00> : vector<64x96xf32>
    %3 = tpu.matmul %1, %2, %cst {dimension_numbers = #tpu.dot_dimension_numbers<[1], [0], [0], [1], [0, 0, 1, 1], [], []>} : vector<64x8xf32>, vector<8x96xf32>, vector<64x96xf32> -> vector<64x96xf32>
    %c0_4 = arith.constant 0 : index
    %c0_5 = arith.constant 0 : index
    %4 = vector.load %arg2[%c0_4, %c0_5] : memref<1x96xf32, #tpu.memory_space<vmem>>, vector<1x96xf32>
    %5 = vector.broadcast %4 : vector<1x96xf32> to vector<64x96xf32>
    %6 = arith.addf %3, %5 : vector<64x96xf32>
    %7 = vector.shape_cast %6 : vector<64x96xf32> to vector<8x8x96xf32>
    %c0_6 = arith.constant 0 : index
    %c0_7 = arith.constant 0 : index
    %c0_8 = arith.constant 0 : index
    %8 = vector.load %arg8[%c0_6, %c0_7, %c0_8] : memref<8x8x96xf32, #tpu.memory_space<vmem>>, vector<8x8x96xf32>
    tpu.vector_store %arg8[%c0_6, %c0_7, %c0_8], %7 {strides = array<i32>} : memref<8x8x96xf32, #tpu.memory_space<vmem>>, vector<8x8x96xf32>,
    %c0_9 = arith.constant 0 : index
    %c0_10 = arith.constant 0 : index
    %9 = vector.load %arg3[%c0_9, %c0_10] : memref<32x96xf32, #tpu.memory_space<vmem>>, vector<32x96xf32>
    %c0_11 = arith.constant 0 : index
    %c0_12 = arith.constant 0 : index
    %10 = vector.load %arg4[%c0_11, %c0_12] : memref<1x96xf32, #tpu.memory_space<vmem>>, vector<1x96xf32>
    %cst_13 = arith.constant 0.000000e+00 : f32
    %11 = vector.broadcast %cst_13 : f32 to vector<8x32xf32>
    %c0_14 = arith.constant 0 : index
    %c0_15 = arith.constant 0 : index
    %c0_16 = arith.constant 0 : index
    %12 = vector.load %arg8[%c0_14, %c0_15, %c0_16] : memref<8x8x96xf32, #tpu.memory_space<vmem>>, vector<1x8x96xf32>
    %13 = vector.shape_cast %12 : vector<1x8x96xf32> to vector<8x96xf32>
    %cst_17 = arith.constant dense<0.000000e+00> : vector<8x96xf32>
    %14 = tpu.matmul %11, %9, %cst_17 {dimension_numbers = #tpu.dot_dimension_numbers<[1], [0], [0], [1], [0, 0, 1, 1], [], []>} : vector<8x32xf32>, vector<32x96xf32>, vector<8x96xf32> -> vector<8x96xf32>
    %15 = vector.broadcast %10 : vector<1x96xf32> to vector<8x96xf32>
    %16 = arith.addf %14, %15 : vector<8x96xf32>
    %17 = vector.extract_strided_slice %13 {offsets = [0, 0], sizes = [8, 64], strides = [1, 1]} : vector<8x96xf32> to vector<8x64xf32>
    %18 = vector.extract_strided_slice %16 {offsets = [0, 0], sizes = [8, 64], strides = [1, 1]} : vector<8x96xf32> to vector<8x64xf32>
    %19 = arith.addf %17, %18 : vector<8x64xf32>
    %20 = arith.negf %19 : vector<8x64xf32>
    %21 = math.exp %20 : vector<8x64xf32>
    %cst_18 = arith.constant 1.000000e+00 : f32
    %22 = vector.broadcast %cst_18 : f32 to vector<8x64xf32>
    %23 = arith.addf %22, %21 : vector<8x64xf32>
    %24 = arith.divf %22, %23 : vector<8x64xf32>
    %25 = vector.extract_strided_slice %24 {offsets = [0, 0], sizes = [8, 32], strides = [1, 1]} : vector<8x64xf32> to vector<8x32xf32>
    %26 = vector.extract_strided_slice %24 {offsets = [0, 32], sizes = [8, 32], strides = [1, 1]} : vector<8x64xf32> to vector<8x32xf32>
    %27 = vector.extract_strided_slice %13 {offsets = [0, 64], sizes = [8, 32], strides = [1, 1]} : vector<8x96xf32> to vector<8x32xf32>
    %28 = vector.extract_strided_slice %16 {offsets = [0, 64], sizes = [8, 32], strides = [1, 1]} : vector<8x96xf32> to vector<8x32xf32>
    %29 = arith.mulf %25, %28 : vector<8x32xf32>
    %30 = arith.addf %27, %29 : vector<8x32xf32>
    %31 = math.tanh %30 : vector<8x32xf32>
    %32 = arith.subf %11, %31 : vector<8x32xf32>
    %33 = arith.mulf %26, %32 : vector<8x32xf32>
    %34 = arith.addf %31, %33 : vector<8x32xf32>
    %c0_19 = arith.constant 0 : index
    %c0_20 = arith.constant 0 : index
    %c0_21 = arith.constant 0 : index
    %35 = vector.load %arg9[%c0_19, %c0_20, %c0_21] : memref<8x8x32xf32, #tpu.memory_space<vmem>>, vector<1x8x32xf32>
    %36 = vector.shape_cast %35 : vector<1x8x32xf32> to vector<8x32xf32>
    %37 = vector.shape_cast %34 : vector<8x32xf32> to vector<1x8x32xf32>
    tpu.vector_store %arg9[%c0_19, %c0_20, %c0_21], %37 {strides = array<i32>} : memref<8x8x32xf32, #tpu.memory_space<vmem>>, vector<1x8x32xf32>,
    %c1 = arith.constant 1 : index
    %c0_22 = arith.constant 0 : index
    %c0_23 = arith.constant 0 : index
    %38 = vector.load %arg8[%c1, %c0_22, %c0_23] : memref<8x8x96xf32, #tpu.memory_space<vmem>>, vector<1x8x96xf32>
    %39 = vector.shape_cast %38 : vector<1x8x96xf32> to vector<8x96xf32>
    %cst_24 = arith.constant dense<0.000000e+00> : vector<8x96xf32>
    %40 = tpu.matmul %34, %9, %cst_24 {dimension_numbers = #tpu.dot_dimension_numbers<[1], [0], [0], [1], [0, 0, 1, 1], [], []>} : vector<8x32xf32>, vector<32x96xf32>, vector<8x96xf32> -> vector<8x96xf32>
    %41 = vector.broadcast %10 : vector<1x96xf32> to vector<8x96xf32>
    %42 = arith.addf %40, %41 : vector<8x96xf32>
    %43 = vector.extract_strided_slice %39 {offsets = [0, 0], sizes = [8, 64], strides = [1, 1]} : vector<8x96xf32> to vector<8x64xf32>
    %44 = vector.extract_strided_slice %42 {offsets = [0, 0], sizes = [8, 64], strides = [1, 1]} : vector<8x96xf32> to vector<8x64xf32>
    %45 = arith.addf %43, %44 : vector<8x64xf32>
    %46 = arith.negf %45 : vector<8x64xf32>
    %47 = math.exp %46 : vector<8x64xf32>
    %cst_25 = arith.constant 1.000000e+00 : f32
    %48 = vector.broadcast %cst_25 : f32 to vector<8x64xf32>
    %49 = arith.addf %48, %47 : vector<8x64xf32>
    %50 = arith.divf %48, %49 : vector<8x64xf32>
    %51 = vector.extract_strided_slice %50 {offsets = [0, 0], sizes = [8, 32], strides = [1, 1]} : vector<8x64xf32> to vector<8x32xf32>
    %52 = vector.extract_strided_slice %50 {offsets = [0, 32], sizes = [8, 32], strides = [1, 1]} : vector<8x64xf32> to vector<8x32xf32>
    %53 = vector.extract_strided_slice %39 {offsets = [0, 64], sizes = [8, 32], strides = [1, 1]} : vector<8x96xf32> to vector<8x32xf32>
    %54 = vector.extract_strided_slice %42 {offsets = [0, 64], sizes = [8, 32], strides = [1, 1]} : vector<8x96xf32> to vector<8x32xf32>
    %55 = arith.mulf %51, %54 : vector<8x32xf32>
    %56 = arith.addf %53, %55 : vector<8x32xf32>
    %57 = math.tanh %56 : vector<8x32xf32>
    %58 = arith.subf %34, %57 : vector<8x32xf32>
    %59 = arith.mulf %52, %58 : vector<8x32xf32>
    %60 = arith.addf %57, %59 : vector<8x32xf32>
    %c1_26 = arith.constant 1 : index
    %c0_27 = arith.constant 0 : index
    %c0_28 = arith.constant 0 : index
    %61 = vector.load %arg9[%c1_26, %c0_27, %c0_28] : memref<8x8x32xf32, #tpu.memory_space<vmem>>, vector<1x8x32xf32>
    %62 = vector.shape_cast %61 : vector<1x8x32xf32> to vector<8x32xf32>
    %63 = vector.shape_cast %60 : vector<8x32xf32> to vector<1x8x32xf32>
    tpu.vector_store %arg9[%c1_26, %c0_27, %c0_28], %63 {strides = array<i32>} : memref<8x8x32xf32, #tpu.memory_space<vmem>>, vector<1x8x32xf32>,
    %c2 = arith.constant 2 : index
    %c0_29 = arith.constant 0 : index
    %c0_30 = arith.constant 0 : index
    %64 = vector.load %arg8[%c2, %c0_29, %c0_30] : memref<8x8x96xf32, #tpu.memory_space<vmem>>, vector<1x8x96xf32>
    %65 = vector.shape_cast %64 : vector<1x8x96xf32> to vector<8x96xf32>
    %cst_31 = arith.constant dense<0.000000e+00> : vector<8x96xf32>
    %66 = tpu.matmul %60, %9, %cst_31 {dimension_numbers = #tpu.dot_dimension_numbers<[1], [0], [0], [1], [0, 0, 1, 1], [], []>} : vector<8x32xf32>, vector<32x96xf32>, vector<8x96xf32> -> vector<8x96xf32>
    %67 = vector.broadcast %10 : vector<1x96xf32> to vector<8x96xf32>
    %68 = arith.addf %66, %67 : vector<8x96xf32>
    %69 = vector.extract_strided_slice %65 {offsets = [0, 0], sizes = [8, 64], strides = [1, 1]} : vector<8x96xf32> to vector<8x64xf32>
    %70 = vector.extract_strided_slice %68 {offsets = [0, 0], sizes = [8, 64], strides = [1, 1]} : vector<8x96xf32> to vector<8x64xf32>
    %71 = arith.addf %69, %70 : vector<8x64xf32>
    %72 = arith.negf %71 : vector<8x64xf32>
    %73 = math.exp %72 : vector<8x64xf32>
    %cst_32 = arith.constant 1.000000e+00 : f32
    %74 = vector.broadcast %cst_32 : f32 to vector<8x64xf32>
    %75 = arith.addf %74, %73 : vector<8x64xf32>
    %76 = arith.divf %74, %75 : vector<8x64xf32>
    %77 = vector.extract_strided_slice %76 {offsets = [0, 0], sizes = [8, 32], strides = [1, 1]} : vector<8x64xf32> to vector<8x32xf32>
    %78 = vector.extract_strided_slice %76 {offsets = [0, 32], sizes = [8, 32], strides = [1, 1]} : vector<8x64xf32> to vector<8x32xf32>
    %79 = vector.extract_strided_slice %65 {offsets = [0, 64], sizes = [8, 32], strides = [1, 1]} : vector<8x96xf32> to vector<8x32xf32>
    %80 = vector.extract_strided_slice %68 {offsets = [0, 64], sizes = [8, 32], strides = [1, 1]} : vector<8x96xf32> to vector<8x32xf32>
    %81 = arith.mulf %77, %80 : vector<8x32xf32>
    %82 = arith.addf %79, %81 : vector<8x32xf32>
    %83 = math.tanh %82 : vector<8x32xf32>
    %84 = arith.subf %60, %83 : vector<8x32xf32>
    %85 = arith.mulf %78, %84 : vector<8x32xf32>
    %86 = arith.addf %83, %85 : vector<8x32xf32>
    %c2_33 = arith.constant 2 : index
    %c0_34 = arith.constant 0 : index
    %c0_35 = arith.constant 0 : index
    %87 = vector.load %arg9[%c2_33, %c0_34, %c0_35] : memref<8x8x32xf32, #tpu.memory_space<vmem>>, vector<1x8x32xf32>
    %88 = vector.shape_cast %87 : vector<1x8x32xf32> to vector<8x32xf32>
    %89 = vector.shape_cast %86 : vector<8x32xf32> to vector<1x8x32xf32>
    tpu.vector_store %arg9[%c2_33, %c0_34, %c0_35], %89 {strides = array<i32>} : memref<8x8x32xf32, #tpu.memory_space<vmem>>, vector<1x8x32xf32>,
    %c3 = arith.constant 3 : index
    %c0_36 = arith.constant 0 : index
    %c0_37 = arith.constant 0 : index
    %90 = vector.load %arg8[%c3, %c0_36, %c0_37] : memref<8x8x96xf32, #tpu.memory_space<vmem>>, vector<1x8x96xf32>
    %91 = vector.shape_cast %90 : vector<1x8x96xf32> to vector<8x96xf32>
    %cst_38 = arith.constant dense<0.000000e+00> : vector<8x96xf32>
    %92 = tpu.matmul %86, %9, %cst_38 {dimension_numbers = #tpu.dot_dimension_numbers<[1], [0], [0], [1], [0, 0, 1, 1], [], []>} : vector<8x32xf32>, vector<32x96xf32>, vector<8x96xf32> -> vector<8x96xf32>
    %93 = vector.broadcast %10 : vector<1x96xf32> to vector<8x96xf32>
    %94 = arith.addf %92, %93 : vector<8x96xf32>
    %95 = vector.extract_strided_slice %91 {offsets = [0, 0], sizes = [8, 64], strides = [1, 1]} : vector<8x96xf32> to vector<8x64xf32>
    %96 = vector.extract_strided_slice %94 {offsets = [0, 0], sizes = [8, 64], strides = [1, 1]} : vector<8x96xf32> to vector<8x64xf32>
    %97 = arith.addf %95, %96 : vector<8x64xf32>
    %98 = arith.negf %97 : vector<8x64xf32>
    %99 = math.exp %98 : vector<8x64xf32>
    %cst_39 = arith.constant 1.000000e+00 : f32
    %100 = vector.broadcast %cst_39 : f32 to vector<8x64xf32>
    %101 = arith.addf %100, %99 : vector<8x64xf32>
    %102 = arith.divf %100, %101 : vector<8x64xf32>
    %103 = vector.extract_strided_slice %102 {offsets = [0, 0], sizes = [8, 32], strides = [1, 1]} : vector<8x64xf32> to vector<8x32xf32>
    %104 = vector.extract_strided_slice %102 {offsets = [0, 32], sizes = [8, 32], strides = [1, 1]} : vector<8x64xf32> to vector<8x32xf32>
    %105 = vector.extract_strided_slice %91 {offsets = [0, 64], sizes = [8, 32], strides = [1, 1]} : vector<8x96xf32> to vector<8x32xf32>
    %106 = vector.extract_strided_slice %94 {offsets = [0, 64], sizes = [8, 32], strides = [1, 1]} : vector<8x96xf32> to vector<8x32xf32>
    %107 = arith.mulf %103, %106 : vector<8x32xf32>
    %108 = arith.addf %105, %107 : vector<8x32xf32>
    %109 = math.tanh %108 : vector<8x32xf32>
    %110 = arith.subf %86, %109 : vector<8x32xf32>
    %111 = arith.mulf %104, %110 : vector<8x32xf32>
    %112 = arith.addf %109, %111 : vector<8x32xf32>
    %c3_40 = arith.constant 3 : index
    %c0_41 = arith.constant 0 : index
    %c0_42 = arith.constant 0 : index
    %113 = vector.load %arg9[%c3_40, %c0_41, %c0_42] : memref<8x8x32xf32, #tpu.memory_space<vmem>>, vector<1x8x32xf32>
    %114 = vector.shape_cast %113 : vector<1x8x32xf32> to vector<8x32xf32>
    %115 = vector.shape_cast %112 : vector<8x32xf32> to vector<1x8x32xf32>
    tpu.vector_store %arg9[%c3_40, %c0_41, %c0_42], %115 {strides = array<i32>} : memref<8x8x32xf32, #tpu.memory_space<vmem>>, vector<1x8x32xf32>,
    %c4 = arith.constant 4 : index
    %c0_43 = arith.constant 0 : index
    %c0_44 = arith.constant 0 : index
    %116 = vector.load %arg8[%c4, %c0_43, %c0_44] : memref<8x8x96xf32, #tpu.memory_space<vmem>>, vector<1x8x96xf32>
    %117 = vector.shape_cast %116 : vector<1x8x96xf32> to vector<8x96xf32>
    %cst_45 = arith.constant dense<0.000000e+00> : vector<8x96xf32>
    %118 = tpu.matmul %112, %9, %cst_45 {dimension_numbers = #tpu.dot_dimension_numbers<[1], [0], [0], [1], [0, 0, 1, 1], [], []>} : vector<8x32xf32>, vector<32x96xf32>, vector<8x96xf32> -> vector<8x96xf32>
    %119 = vector.broadcast %10 : vector<1x96xf32> to vector<8x96xf32>
    %120 = arith.addf %118, %119 : vector<8x96xf32>
    %121 = vector.extract_strided_slice %117 {offsets = [0, 0], sizes = [8, 64], strides = [1, 1]} : vector<8x96xf32> to vector<8x64xf32>
    %122 = vector.extract_strided_slice %120 {offsets = [0, 0], sizes = [8, 64], strides = [1, 1]} : vector<8x96xf32> to vector<8x64xf32>
    %123 = arith.addf %121, %122 : vector<8x64xf32>
    %124 = arith.negf %123 : vector<8x64xf32>
    %125 = math.exp %124 : vector<8x64xf32>
    %cst_46 = arith.constant 1.000000e+00 : f32
    %126 = vector.broadcast %cst_46 : f32 to vector<8x64xf32>
    %127 = arith.addf %126, %125 : vector<8x64xf32>
    %128 = arith.divf %126, %127 : vector<8x64xf32>
    %129 = vector.extract_strided_slice %128 {offsets = [0, 0], sizes = [8, 32], strides = [1, 1]} : vector<8x64xf32> to vector<8x32xf32>
    %130 = vector.extract_strided_slice %128 {offsets = [0, 32], sizes = [8, 32], strides = [1, 1]} : vector<8x64xf32> to vector<8x32xf32>
    %131 = vector.extract_strided_slice %117 {offsets = [0, 64], sizes = [8, 32], strides = [1, 1]} : vector<8x96xf32> to vector<8x32xf32>
    %132 = vector.extract_strided_slice %120 {offsets = [0, 64], sizes = [8, 32], strides = [1, 1]} : vector<8x96xf32> to vector<8x32xf32>
    %133 = arith.mulf %129, %132 : vector<8x32xf32>
    %134 = arith.addf %131, %133 : vector<8x32xf32>
    %135 = math.tanh %134 : vector<8x32xf32>
    %136 = arith.subf %112, %135 : vector<8x32xf32>
    %137 = arith.mulf %130, %136 : vector<8x32xf32>
    %138 = arith.addf %135, %137 : vector<8x32xf32>
    %c4_47 = arith.constant 4 : index
    %c0_48 = arith.constant 0 : index
    %c0_49 = arith.constant 0 : index
    %139 = vector.load %arg9[%c4_47, %c0_48, %c0_49] : memref<8x8x32xf32, #tpu.memory_space<vmem>>, vector<1x8x32xf32>
    %140 = vector.shape_cast %139 : vector<1x8x32xf32> to vector<8x32xf32>
    %141 = vector.shape_cast %138 : vector<8x32xf32> to vector<1x8x32xf32>
    tpu.vector_store %arg9[%c4_47, %c0_48, %c0_49], %141 {strides = array<i32>} : memref<8x8x32xf32, #tpu.memory_space<vmem>>, vector<1x8x32xf32>,
    %c5 = arith.constant 5 : index
    %c0_50 = arith.constant 0 : index
    %c0_51 = arith.constant 0 : index
    %142 = vector.load %arg8[%c5, %c0_50, %c0_51] : memref<8x8x96xf32, #tpu.memory_space<vmem>>, vector<1x8x96xf32>
    %143 = vector.shape_cast %142 : vector<1x8x96xf32> to vector<8x96xf32>
    %cst_52 = arith.constant dense<0.000000e+00> : vector<8x96xf32>
    %144 = tpu.matmul %138, %9, %cst_52 {dimension_numbers = #tpu.dot_dimension_numbers<[1], [0], [0], [1], [0, 0, 1, 1], [], []>} : vector<8x32xf32>, vector<32x96xf32>, vector<8x96xf32> -> vector<8x96xf32>
    %145 = vector.broadcast %10 : vector<1x96xf32> to vector<8x96xf32>
    %146 = arith.addf %144, %145 : vector<8x96xf32>
    %147 = vector.extract_strided_slice %143 {offsets = [0, 0], sizes = [8, 64], strides = [1, 1]} : vector<8x96xf32> to vector<8x64xf32>
    %148 = vector.extract_strided_slice %146 {offsets = [0, 0], sizes = [8, 64], strides = [1, 1]} : vector<8x96xf32> to vector<8x64xf32>
    %149 = arith.addf %147, %148 : vector<8x64xf32>
    %150 = arith.negf %149 : vector<8x64xf32>
    %151 = math.exp %150 : vector<8x64xf32>
    %cst_53 = arith.constant 1.000000e+00 : f32
    %152 = vector.broadcast %cst_53 : f32 to vector<8x64xf32>
    %153 = arith.addf %152, %151 : vector<8x64xf32>
    %154 = arith.divf %152, %153 : vector<8x64xf32>
    %155 = vector.extract_strided_slice %154 {offsets = [0, 0], sizes = [8, 32], strides = [1, 1]} : vector<8x64xf32> to vector<8x32xf32>
    %156 = vector.extract_strided_slice %154 {offsets = [0, 32], sizes = [8, 32], strides = [1, 1]} : vector<8x64xf32> to vector<8x32xf32>
    %157 = vector.extract_strided_slice %143 {offsets = [0, 64], sizes = [8, 32], strides = [1, 1]} : vector<8x96xf32> to vector<8x32xf32>
    %158 = vector.extract_strided_slice %146 {offsets = [0, 64], sizes = [8, 32], strides = [1, 1]} : vector<8x96xf32> to vector<8x32xf32>
    %159 = arith.mulf %155, %158 : vector<8x32xf32>
    %160 = arith.addf %157, %159 : vector<8x32xf32>
    %161 = math.tanh %160 : vector<8x32xf32>
    %162 = arith.subf %138, %161 : vector<8x32xf32>
    %163 = arith.mulf %156, %162 : vector<8x32xf32>
    %164 = arith.addf %161, %163 : vector<8x32xf32>
    %c5_54 = arith.constant 5 : index
    %c0_55 = arith.constant 0 : index
    %c0_56 = arith.constant 0 : index
    %165 = vector.load %arg9[%c5_54, %c0_55, %c0_56] : memref<8x8x32xf32, #tpu.memory_space<vmem>>, vector<1x8x32xf32>
    %166 = vector.shape_cast %165 : vector<1x8x32xf32> to vector<8x32xf32>
    %167 = vector.shape_cast %164 : vector<8x32xf32> to vector<1x8x32xf32>
    tpu.vector_store %arg9[%c5_54, %c0_55, %c0_56], %167 {strides = array<i32>} : memref<8x8x32xf32, #tpu.memory_space<vmem>>, vector<1x8x32xf32>,
    %c6 = arith.constant 6 : index
    %c0_57 = arith.constant 0 : index
    %c0_58 = arith.constant 0 : index
    %168 = vector.load %arg8[%c6, %c0_57, %c0_58] : memref<8x8x96xf32, #tpu.memory_space<vmem>>, vector<1x8x96xf32>
    %169 = vector.shape_cast %168 : vector<1x8x96xf32> to vector<8x96xf32>
    %cst_59 = arith.constant dense<0.000000e+00> : vector<8x96xf32>
    %170 = tpu.matmul %164, %9, %cst_59 {dimension_numbers = #tpu.dot_dimension_numbers<[1], [0], [0], [1], [0, 0, 1, 1], [], []>} : vector<8x32xf32>, vector<32x96xf32>, vector<8x96xf32> -> vector<8x96xf32>
    %171 = vector.broadcast %10 : vector<1x96xf32> to vector<8x96xf32>
    %172 = arith.addf %170, %171 : vector<8x96xf32>
    %173 = vector.extract_strided_slice %169 {offsets = [0, 0], sizes = [8, 64], strides = [1, 1]} : vector<8x96xf32> to vector<8x64xf32>
    %174 = vector.extract_strided_slice %172 {offsets = [0, 0], sizes = [8, 64], strides = [1, 1]} : vector<8x96xf32> to vector<8x64xf32>
    %175 = arith.addf %173, %174 : vector<8x64xf32>
    %176 = arith.negf %175 : vector<8x64xf32>
    %177 = math.exp %176 : vector<8x64xf32>
    %cst_60 = arith.constant 1.000000e+00 : f32
    %178 = vector.broadcast %cst_60 : f32 to vector<8x64xf32>
    %179 = arith.addf %178, %177 : vector<8x64xf32>
    %180 = arith.divf %178, %179 : vector<8x64xf32>
    %181 = vector.extract_strided_slice %180 {offsets = [0, 0], sizes = [8, 32], strides = [1, 1]} : vector<8x64xf32> to vector<8x32xf32>
    %182 = vector.extract_strided_slice %180 {offsets = [0, 32], sizes = [8, 32], strides = [1, 1]} : vector<8x64xf32> to vector<8x32xf32>
    %183 = vector.extract_strided_slice %169 {offsets = [0, 64], sizes = [8, 32], strides = [1, 1]} : vector<8x96xf32> to vector<8x32xf32>
    %184 = vector.extract_strided_slice %172 {offsets = [0, 64], sizes = [8, 32], strides = [1, 1]} : vector<8x96xf32> to vector<8x32xf32>
    %185 = arith.mulf %181, %184 : vector<8x32xf32>
    %186 = arith.addf %183, %185 : vector<8x32xf32>
    %187 = math.tanh %186 : vector<8x32xf32>
    %188 = arith.subf %164, %187 : vector<8x32xf32>
    %189 = arith.mulf %182, %188 : vector<8x32xf32>
    %190 = arith.addf %187, %189 : vector<8x32xf32>
    %c6_61 = arith.constant 6 : index
    %c0_62 = arith.constant 0 : index
    %c0_63 = arith.constant 0 : index
    %191 = vector.load %arg9[%c6_61, %c0_62, %c0_63] : memref<8x8x32xf32, #tpu.memory_space<vmem>>, vector<1x8x32xf32>
    %192 = vector.shape_cast %191 : vector<1x8x32xf32> to vector<8x32xf32>
    %193 = vector.shape_cast %190 : vector<8x32xf32> to vector<1x8x32xf32>
    tpu.vector_store %arg9[%c6_61, %c0_62, %c0_63], %193 {strides = array<i32>} : memref<8x8x32xf32, #tpu.memory_space<vmem>>, vector<1x8x32xf32>,
    %c7 = arith.constant 7 : index
    %c0_64 = arith.constant 0 : index
    %c0_65 = arith.constant 0 : index
    %194 = vector.load %arg8[%c7, %c0_64, %c0_65] : memref<8x8x96xf32, #tpu.memory_space<vmem>>, vector<1x8x96xf32>
    %195 = vector.shape_cast %194 : vector<1x8x96xf32> to vector<8x96xf32>
    %cst_66 = arith.constant dense<0.000000e+00> : vector<8x96xf32>
    %196 = tpu.matmul %190, %9, %cst_66 {dimension_numbers = #tpu.dot_dimension_numbers<[1], [0], [0], [1], [0, 0, 1, 1], [], []>} : vector<8x32xf32>, vector<32x96xf32>, vector<8x96xf32> -> vector<8x96xf32>
    %197 = vector.broadcast %10 : vector<1x96xf32> to vector<8x96xf32>
    %198 = arith.addf %196, %197 : vector<8x96xf32>
    %199 = vector.extract_strided_slice %195 {offsets = [0, 0], sizes = [8, 64], strides = [1, 1]} : vector<8x96xf32> to vector<8x64xf32>
    %200 = vector.extract_strided_slice %198 {offsets = [0, 0], sizes = [8, 64], strides = [1, 1]} : vector<8x96xf32> to vector<8x64xf32>
    %201 = arith.addf %199, %200 : vector<8x64xf32>
    %202 = arith.negf %201 : vector<8x64xf32>
    %203 = math.exp %202 : vector<8x64xf32>
    %cst_67 = arith.constant 1.000000e+00 : f32
    %204 = vector.broadcast %cst_67 : f32 to vector<8x64xf32>
    %205 = arith.addf %204, %203 : vector<8x64xf32>
    %206 = arith.divf %204, %205 : vector<8x64xf32>
    %207 = vector.extract_strided_slice %206 {offsets = [0, 0], sizes = [8, 32], strides = [1, 1]} : vector<8x64xf32> to vector<8x32xf32>
    %208 = vector.extract_strided_slice %206 {offsets = [0, 32], sizes = [8, 32], strides = [1, 1]} : vector<8x64xf32> to vector<8x32xf32>
    %209 = vector.extract_strided_slice %195 {offsets = [0, 64], sizes = [8, 32], strides = [1, 1]} : vector<8x96xf32> to vector<8x32xf32>
    %210 = vector.extract_strided_slice %198 {offsets = [0, 64], sizes = [8, 32], strides = [1, 1]} : vector<8x96xf32> to vector<8x32xf32>
    %211 = arith.mulf %207, %210 : vector<8x32xf32>
    %212 = arith.addf %209, %211 : vector<8x32xf32>
    %213 = math.tanh %212 : vector<8x32xf32>
    %214 = arith.subf %190, %213 : vector<8x32xf32>
    %215 = arith.mulf %208, %214 : vector<8x32xf32>
    %216 = arith.addf %213, %215 : vector<8x32xf32>
    %c7_68 = arith.constant 7 : index
    %c0_69 = arith.constant 0 : index
    %c0_70 = arith.constant 0 : index
    %217 = vector.load %arg9[%c7_68, %c0_69, %c0_70] : memref<8x8x32xf32, #tpu.memory_space<vmem>>, vector<1x8x32xf32>
    %218 = vector.shape_cast %217 : vector<1x8x32xf32> to vector<8x32xf32>
    %219 = vector.shape_cast %216 : vector<8x32xf32> to vector<1x8x32xf32>
    tpu.vector_store %arg9[%c7_68, %c0_69, %c0_70], %219 {strides = array<i32>} : memref<8x8x32xf32, #tpu.memory_space<vmem>>, vector<1x8x32xf32>,
    %c0_71 = arith.constant 0 : index
    %c0_72 = arith.constant 0 : index
    %c0_73 = arith.constant 0 : index
    %220 = vector.load %arg9[%c0_71, %c0_72, %c0_73] : memref<8x8x32xf32, #tpu.memory_space<vmem>>, vector<8x8x32xf32>
    %221 = vector.shape_cast %220 : vector<8x8x32xf32> to vector<64x32xf32>
    %c0_74 = arith.constant 0 : index
    %c0_75 = arith.constant 0 : index
    %222 = vector.load %arg5[%c0_74, %c0_75] : memref<32x4xf32, #tpu.memory_space<vmem>>, vector<32x4xf32>
    %cst_76 = arith.constant dense<0.000000e+00> : vector<64x4xf32>
    %223 = tpu.matmul %221, %222, %cst_76 {dimension_numbers = #tpu.dot_dimension_numbers<[1], [0], [0], [1], [0, 0, 1, 1], [], []>} : vector<64x32xf32>, vector<32x4xf32>, vector<64x4xf32> -> vector<64x4xf32>
    %c0_77 = arith.constant 0 : index
    %c0_78 = arith.constant 0 : index
    %224 = vector.load %arg6[%c0_77, %c0_78] : memref<1x4xf32, #tpu.memory_space<vmem>>, vector<1x4xf32>
    %225 = vector.broadcast %224 : vector<1x4xf32> to vector<64x4xf32>
    %226 = arith.addf %223, %225 : vector<64x4xf32>
    %227 = vector.shape_cast %226 : vector<64x4xf32> to vector<8x8x4xf32>
    %c0_79 = arith.constant 0 : index
    %c0_80 = arith.constant 0 : index
    %c0_81 = arith.constant 0 : index
    %228 = vector.load %arg7[%c0_79, %c0_80, %c0_81] : memref<8x8x4xf32, #tpu.memory_space<vmem>>, vector<8x8x4xf32>
    tpu.vector_store %arg7[%c0_79, %c0_80, %c0_81], %227 {strides = array<i32>} : memref<8x8x4xf32, #tpu.memory_space<vmem>>, vector<8x8x4xf32>,
    return
  }
}

</mosaic_0001>

<llo_original>
// kernel: tpu_custom_call.1
$region0: #{tpu_custom_call.1}
  #allocation0 [shape = 'u32[]', space=smem, size = 0x4, offset = 0x4, fixed_abs, tag = 'smem constant byte address 0x4 - core index']
  #allocation1 [shape = 'u32[72,128]{1,0:T(1,128)}', space=vmem, size = 0x9000, scoped, tag = 'internal scratch']
  #allocation2 [shape = 'f32[8,8,96]{2,1,0:T(8,128)}', space=vmem, size = 0x8000, scoped, tag = 'scratch operand']
  #allocation3 [shape = 'f32[8,8,32]{2,1,0:T(8,128)}', space=vmem, size = 0x8000, scoped, tag = 'scratch operand']
  %s0 = inlined_call_operand.hbm [shape: f32[8,8,8], index: 0, kind: input, shape index: {}]
  %s1 = inlined_call_operand.hbm [shape: f32[8,96], index: 1, kind: input, shape index: {}]
  %s2 = inlined_call_operand.vmem [shape: f32[1,96], index: 2, kind: input, shape index: {}]
  %s3 = inlined_call_operand.vmem [shape: f32[32,96], index: 3, kind: input, shape index: {}]
  %s4 = inlined_call_operand.vmem [shape: f32[1,96], index: 4, kind: input, shape index: {}]
  %s5 = inlined_call_operand.vmem [shape: f32[32,4], index: 5, kind: input, shape index: {}]
  %s6 = inlined_call_operand.vmem [shape: f32[1,4], index: 6, kind: input, shape index: {}]
  %s7 = inlined_call_operand.vmem [shape: f32[8,8,4], index: 7, kind: output, shape index: {}]
  %s8 = sld [smem:[#allocation0]]
  $region46: #{tpu_custom_call.1} parent=0
    _
  %s10 = ssub.s32 1, %s8
  %s11 = scalar_select 0, %s10, %s8
  $region1: #{tpu_custom_call.1} parent=0
    #allocation4 [shape = 'u8[32768]{0}', space=vmem, size = 0x8000, scoped, tag = 'input window, operand 0, single buffered']
    #allocation5 [shape = 's32[1]{0}', space=sflag, size = 0x4, scoped, tag = 'scoped memory for tpu_custom_call.1']
    #allocation6 [shape = 'u8[4096]{0}', space=vmem, size = 0x1000, scoped, tag = 'input window, operand 1, single buffered']
    #allocation7 [shape = 's32[1]{0}', space=sflag, size = 0x4, scoped, tag = 'scoped memory for tpu_custom_call.1']
    %12 = vsyncpa [#allocation5], 0
    %13 = vsyncpa [#allocation7], 0
    // Predicated region
    $region2: #{tpu_custom_call.1} parent=1 // pred_check
      _
    $region3: #{tpu_custom_call.1} parent=1 // pred_check_branch
      %15 = sbr.rel (0) target = $region5
    $region4: #{tpu_custom_call.1} parent=1 // pred_region
      %17 = vsyncadd [#allocation5], 0
      %s18 = sshll.u32 %s0, 4
      %s19 = int_to_ptr.hbm [resolvable:$true] %s18
      %s20 = sshll.u32 [#allocation4], 4
      %s21 = int_to_ptr.vmem [resolvable:$true] %s20
      %26 = dma.hbm_to_vmem [thread:$0]  %s19, 1024, %s21, [#allocation5], 128, 128, 8
    $region5: #{tpu_custom_call.1} parent=1 // pred_fallthru
      _
    // Predicated region
    $region6: #{tpu_custom_call.1} parent=1 // pred_check
      _
    $region7: #{tpu_custom_call.1} parent=1 // pred_check_branch
      %28 = sbr.rel (0) target = $region9
    $region8: #{tpu_custom_call.1} parent=1 // pred_region
      %30 = vsyncadd [#allocation7], 0
      %s32 = sshll.u32 %s1, 4
      %s33 = int_to_ptr.hbm [resolvable:$true] %s32
      %s34 = sshll.u32 [#allocation6], 4
      %s35 = int_to_ptr.vmem [resolvable:$true] %s34
      %37 = dma.hbm_to_vmem [thread:$0]  %s33, 128, %s35, [#allocation7]
    $region9: #{tpu_custom_call.1} parent=1 // pred_fallthru
      _
    // Predicated region
    $region10: #{tpu_custom_call.1} parent=1 // pred_check
      _
    $region11: #{tpu_custom_call.1} parent=1 // pred_check_branch
      %39 = sbr.rel (0) target = $region13
    $region12: #{tpu_custom_call.1} parent=1 // pred_region
      _
    $region13: #{tpu_custom_call.1} parent=1 // pred_fallthru
      _
    // Predicated region
    $region14: #{tpu_custom_call.1} parent=1 // pred_check
      _
    $region15: #{tpu_custom_call.1} parent=1 // pred_check_branch
      %41 = sbr.rel (0) target = $region17
    $region16: #{tpu_custom_call.1} parent=1 // pred_region
      _
    $region17: #{tpu_custom_call.1} parent=1 // pred_fallthru
      _
    // Predicated region
    $region18: #{tpu_custom_call.1} parent=1 // pred_check
      _
    $region19: #{tpu_custom_call.1} parent=1 // pred_check_branch
      %43 = sbr.rel (0) target = $region21
    $region20: #{tpu_custom_call.1} parent=1 // pred_region
      _
    $region21: #{tpu_custom_call.1} parent=1 // pred_fallthru
      _
    // Predicated region
    $region22: #{tpu_custom_call.1} parent=1 // pred_check
      _
    $region23: #{tpu_custom_call.1} parent=1 // pred_check_branch
      %45 = sbr.rel (0) target = $region25
    $region24: #{tpu_custom_call.1} parent=1 // pred_region
      _
    $region25: #{tpu_custom_call.1} parent=1 // pred_fallthru
      _
    // Predicated region
    $region26: #{tpu_custom_call.1} parent=1 // pred_check
      _
    $region27: #{tpu_custom_call.1} parent=1 // pred_check_branch
      %47 = sbr.rel (0) target = $region29
    $region28: #{tpu_custom_call.1} parent=1 // pred_region
      _
    $region29: #{tpu_custom_call.1} parent=1 // pred_fallthru
      _
    // Predicated region
    $region30: #{tpu_custom_call.1} parent=1 // pred_check
      _
    $region31: #{tpu_custom_call.1} parent=1 // pred_check_branch
      %49 = sbr.rel (0) target = $region33
    $region32: #{tpu_custom_call.1} parent=1 // pred_region
      %51 = dma.done [#allocation5], 1024
    $region33: #{tpu_custom_call.1} parent=1 // pred_fallthru
      _
    // Predicated region
    $region34: #{tpu_custom_call.1} parent=1 // pred_check
      _
    $region35: #{tpu_custom_call.1} parent=1 // pred_check_branch
      %53 = sbr.rel (0) target = $region37
    $region36: #{tpu_custom_call.1} parent=1 // pred_region
      %55 = dma.done [#allocation7], 128
    $region37: #{tpu_custom_call.1} parent=1 // pred_fallthru
      _
    %v56 = vld [vmem:[#allocation4] sm:$0xff]
    %v57 = vld [vmem:[#allocation4 + $0x8] sm:$0xff]
    %v58 = vld [vmem:[#allocation4 + $0x10] sm:$0xff]
    %v59 = vld [vmem:[#allocation4 + $0x18] sm:$0xff]
    %v60 = vld [vmem:[#allocation4 + $0x20] sm:$0xff]
    %v61 = vld [vmem:[#allocation4 + $0x28] sm:$0xff]
    %v62 = vld [vmem:[#allocation4 + $0x30] sm:$0xff]
    %v63 = vld [vmem:[#allocation4 + $0x38] sm:$0xff]
    %v64 = vld [vmem:[#allocation6] sm:$0xff]
    %v65 = vld [vmem:[%s2] sm:$0x1]
    %v67 = vperm.slane %v65, 0
    %vm69 = vcmask 64512
    %v71 = vsel %vm69, %v56, 0
    %v74 = vsel %vm69, %v57, 0
    %v77 = vsel %vm69, %v58, 0
    %v80 = vsel %vm69, %v59, 0
    %v83 = vsel %vm69, %v60, 0
    %v86 = vsel %vm69, %v61, 0
    %v89 = vsel %vm69, %v62, 0
    %v92 = vsel %vm69, %v63, 0
    %94 = vmatpush.msra.mxu0 0.0
    %95 = vmatpush.msra.mxu0 0.0
    %96 = vmatpush.msra.mxu0 0.0
    %97 = vmatpush.msra.mxu0 0.0
    %98 = vmatpush.msra.mxu0 0.0
    %99 = vmatpush.msra.mxu0 0.0
    %100 = vmatpush.msra.mxu0 0.0
    %101 = vmatpush.msra.mxu0 0.0
    %102 = vmatpush.msra.mxu0 0.0
    %103 = vmatpush.msra.mxu0 0.0
    %104 = vmatpush.msra.mxu0 0.0
    %105 = vmatpush.msra.mxu0 0.0
    %106 = vmatpush.msra.mxu0 0.0
    %107 = vmatpush.msra.mxu0 0.0
    %108 = vmatpush.msra.mxu0 0.0
    %109 = vmatpush.msra.mxu0 %v64
    %110 = vmatmul.f32.gmra.mxu0 %v71
    %v111 = vpop.f32.mrf.mxu0
    %v112 = vadd.f32 %v67, %v111
    %113 = vmatmul.f32.gmra.mxu0 %v74
    %v114 = vpop.f32.mrf.mxu0
    %v115 = vadd.f32 %v67, %v114
    %116 = vmatmul.f32.gmra.mxu0 %v77
    %v117 = vpop.f32.mrf.mxu0
    %v118 = vadd.f32 %v67, %v117
    %119 = vmatmul.f32.gmra.mxu0 %v80
    %v120 = vpop.f32.mrf.mxu0
    %v121 = vadd.f32 %v67, %v120
    %122 = vmatmul.f32.gmra.mxu0 %v83
    %v123 = vpop.f32.mrf.mxu0
    %v124 = vadd.f32 %v67, %v123
    %125 = vmatmul.f32.gmra.mxu0 %v86
    %v126 = vpop.f32.mrf.mxu0
    %v127 = vadd.f32 %v67, %v126
    %128 = vmatmul.f32.gmra.mxu0 %v89
    %v129 = vpop.f32.mrf.mxu0
    %v130 = vadd.f32 %v67, %v129
    %131 = vmatmul.f32.gmra.mxu0 %v92
    %v132 = vpop.f32.mrf.mxu0
    %v133 = vadd.f32 %v67, %v132
    %134 = vdwg.mxu0
    %vm135 = vcmask 785408
    %136 = vst.msk [vmem:[#allocation2] sm:$0xff] %vm135, %v112
    %137 = vst.msk [vmem:[#allocation2 + $0x8] sm:$0xff] %vm135, %v115
    %138 = vst.msk [vmem:[#allocation2 + $0x10] sm:$0xff] %vm135, %v118
    %139 = vst.msk [vmem:[#allocation2 + $0x18] sm:$0xff] %vm135, %v121
    %140 = vst.msk [vmem:[#allocation2 + $0x20] sm:$0xff] %vm135, %v124
    %141 = vst.msk [vmem:[#allocation2 + $0x28] sm:$0xff] %vm135, %v127
    %142 = vst.msk [vmem:[#allocation2 + $0x30] sm:$0xff] %vm135, %v130
    %143 = vst.msk [vmem:[#allocation2 + $0x38] sm:$0xff] %vm135, %v133
    %v144 = vld [vmem:[%s3] sm:$0xff]
    %v145 = vld [vmem:[%s3 + $0x8] sm:$0xff]
    %v146 = vld [vmem:[%s3 + $0x10] sm:$0xff]
    %v147 = vld [vmem:[%s3 + $0x18] sm:$0xff]
    %v148 = vld [vmem:[%s4] sm:$0x1]
    %v149 = vld [vmem:[#allocation2] sm:$0xff]
    %v151 = vperm.slane %v148, 0
    %vm153 = vcmask 261120
    %v155 = vsel %vm153, 0.0, 0
    %157 = vmatpush.msra.mxu0 0.0
    %158 = vmatpush.msra.mxu0 0.0
    %159 = vmatpush.msra.mxu0 0.0
    %160 = vmatpush.msra.mxu0 0.0
    %161 = vmatpush.msra.mxu0 0.0
    %162 = vmatpush.msra.mxu0 0.0
    %163 = vmatpush.msra.mxu0 0.0
    %164 = vmatpush.msra.mxu0 0.0
    %165 = vmatpush.msra.mxu0 0.0
    %166 = vmatpush.msra.mxu0 0.0
    %167 = vmatpush.msra.mxu0 0.0
    %168 = vmatpush.msra.mxu0 0.0
    %169 = vmatpush.msra.mxu0 %v147
    %170 = vmatpush.msra.mxu0 %v146
    %171 = vmatpush.msra.mxu0 %v145
    %172 = vmatpush.msra.mxu0 %v144
    %173 = vmatmul.f32.gmra.mxu0 %v155
    %v174 = vpop.f32.mrf.mxu0
    %v175 = vadd.f32 %v151, %v174
    %176 = vdwg.mxu0
    %v177 = vadd.f32 %v149, %v175
    %v178 = vxor.u32 %v177, 2147483648
    %v179 = vmul.f32 %v178, 1.442695
    %v180 = vpow.pop %v179
    %v181 = vadd.f32 %v180, 1.0
    %v182 = vrcp.pop %v181
    %v183 = vmul.f32 %v181, %v182
    %v184 = vsub.f32 1.0, %v183
    %v185 = vmul.f32 %v182, %v184
    %v186 = vadd.f32 %v182, %v185
    %vm187 = vweird.f32 %v181
    %vm188 = vweird.f32 %v182
    %vm189 = vmor %vm187, %vm188
    %v190 = vsel %vm189, %v182, %v186
    %v191 = vand.u32 2147483647, %v181
    %vm192 = vcmp.eq.f32.partialorder %v191, 8.507059e+37
    %v193 = vand.u32 %v181, 2147483648
    %v194 = vor.u32 1.1754944e-38, %v193
    %v195 = vsel %vm192, %v194, %v190
    %v196 = vmul.f32 1.0, %v195
    %198 = vrot.lane.b32.xlu0 %v175, 64
    %v199 = vpop.permute.xlu0 %198
    %v201 = vmul.f32 %v196, %v199
    %203 = vrot.lane.b32.xlu0 %v201, 64
    %v204 = vpop.permute.xlu0 %203
    %v206 = vadd.f32 %v149, %v204
    %v207 = vtanh.pop %v206
    %v208 = vsub.f32 0.0, %v207
    %210 = vrot.lane.b32.xlu0 %v208, 96
    %v211 = vpop.permute.xlu0 %210
    %v213 = vmul.f32 %v196, %v211
    %215 = vrot.lane.b32.xlu0 %v213, 32
    %v216 = vpop.permute.xlu0 %215
    %v218 = vadd.f32 %v207, %v216
    %220 = vrot.lane.b32.xlu0 %v218, 64
    %v221 = vpop.permute.xlu0 %220
    %223 = vst.msk [vmem:[#allocation3] sm:$0xff] %vm153, %v221
    %s224 = scalar_lea.vmem [#allocation2], 8
    %v225 = vld [vmem:[%s224] sm:$0xff]
    %v226 = vsel %vm153, %v221, 0
    %228 = vmatpush.msra.mxu0 0.0
    %229 = vmatpush.msra.mxu0 0.0
    %230 = vmatpush.msra.mxu0 0.0
    %231 = vmatpush.msra.mxu0 0.0
    %232 = vmatpush.msra.mxu0 0.0
    %233 = vmatpush.msra.mxu0 0.0
    %234 = vmatpush.msra.mxu0 0.0
    %235 = vmatpush.msra.mxu0 0.0
    %236 = vmatpush.msra.mxu0 0.0
    %237 = vmatpush.msra.mxu0 0.0
    %238 = vmatpush.msra.mxu0 0.0
    %239 = vmatpush.msra.mxu0 0.0
    %240 = vmatpush.msra.mxu0 %v147
    %241 = vmatpush.msra.mxu0 %v146
    %242 = vmatpush.msra.mxu0 %v145
    %243 = vmatpush.msra.mxu0 %v144
    %244 = vmatmul.f32.gmra.mxu0 %v226
    %v245 = vpop.f32.mrf.mxu0
    %v246 = vadd.f32 %v151, %v245
    %247 = vdwg.mxu0
    %v248 = vadd.f32 %v225, %v246
    %v249 = vxor.u32 %v248, 2147483648
    %v250 = vmul.f32 %v249, 1.442695
    %v251 = vpow.pop %v250
    %v252 = vadd.f32 %v251, 1.0
    %v253 = vrcp.pop %v252
    %v254 = vmul.f32 %v252, %v253
    %v255 = vsub.f32 1.0, %v254
    %v256 = vmul.f32 %v253, %v255
    %v257 = vadd.f32 %v253, %v256
    %vm258 = vweird.f32 %v252
    %vm259 = vweird.f32 %v253
    %vm260 = vmor %vm258, %vm259
    %v261 = vsel %vm260, %v253, %v257
    %v262 = vand.u32 2147483647, %v252
    %vm263 = vcmp.eq.f32.partialorder %v262, 8.507059e+37
    %v264 = vand.u32 %v252, 2147483648
    %v265 = vor.u32 1.1754944e-38, %v264
    %v266 = vsel %vm263, %v265, %v261
    %v267 = vmul.f32 1.0, %v266
    %269 = vrot.lane.b32.xlu0 %v246, 64
    %v270 = vpop.permute.xlu0 %269
    %v272 = vmul.f32 %v267, %v270
    %274 = vrot.lane.b32.xlu0 %v272, 64
    %v275 = vpop.permute.xlu0 %274
    %v277 = vadd.f32 %v225, %v275
    %v278 = vtanh.pop %v277
    %v279 = vsub.f32 %v218, %v278
    %281 = vrot.lane.b32.xlu0 %v279, 96
    %v282 = vpop.permute.xlu0 %281
    %v284 = vmul.f32 %v267, %v282
    %286 = vrot.lane.b32.xlu0 %v284, 32
    %v287 = vpop.permute.xlu0 %286
    %v289 = vadd.f32 %v278, %v287
    %291 = vrot.lane.b32.xlu0 %v289, 64
    %v292 = vpop.permute.xlu0 %291
    %s294 = scalar_lea.vmem [#allocation3], 8
    %295 = vst.msk [vmem:[%s294] sm:$0xff] %vm153, %v292
    %s296 = scalar_lea.vmem [#allocation2], 16
    %v297 = vld [vmem:[%s296] sm:$0xff]
    %v298 = vsel %vm153, %v292, 0
    %300 = vmatpush.msra.mxu0 0.0
    %301 = vmatpush.msra.mxu0 0.0
    %302 = vmatpush.msra.mxu0 0.0
    %303 = vmatpush.msra.mxu0 0.0
    %304 = vmatpush.msra.mxu0 0.0
    %305 = vmatpush.msra.mxu0 0.0
    %306 = vmatpush.msra.mxu0 0.0
    %307 = vmatpush.msra.mxu0 0.0
    %308 = vmatpush.msra.mxu0 0.0
    %309 = vmatpush.msra.mxu0 0.0
    %310 = vmatpush.msra.mxu0 0.0
    %311 = vmatpush.msra.mxu0 0.0
    %312 = vmatpush.msra.mxu0 %v147
    %313 = vmatpush.msra.mxu0 %v146
    %314 = vmatpush.msra.mxu0 %v145
    %315 = vmatpush.msra.mxu0 %v144
    %316 = vmatmul.f32.gmra.mxu0 %v298
    %v317 = vpop.f32.mrf.mxu0
    %v318 = vadd.f32 %v151, %v317
    %319 = vdwg.mxu0
    %v320 = vadd.f32 %v297, %v318
    %v321 = vxor.u32 %v320, 2147483648
    %v322 = vmul.f32 %v321, 1.442695
    %v323 = vpow.pop %v322
    %v324 = vadd.f32 %v323, 1.0
    %v325 = vrcp.pop %v324
    %v326 = vmul.f32 %v324, %v325
    %v327 = vsub.f32 1.0, %v326
    %v328 = vmul.f32 %v325, %v327
    %v329 = vadd.f32 %v325, %v328
    %vm330 = vweird.f32 %v324
    %vm331 = vweird.f32 %v325
    %vm332 = vmor %vm330, %vm331
    %v333 = vsel %vm332, %v325, %v329
    %v334 = vand.u32 2147483647, %v324
    %vm335 = vcmp.eq.f32.partialorder %v334, 8.507059e+37
    %v336 = vand.u32 %v324, 2147483648
    %v337 = vor.u32 1.1754944e-38, %v336
    %v338 = vsel %vm335, %v337, %v333
    %v339 = vmul.f32 1.0, %v338
    %341 = vrot.lane.b32.xlu0 %v318, 64
    %v342 = vpop.permute.xlu0 %341
    %v344 = vmul.f32 %v339, %v342
    %346 = vrot.lane.b32.xlu0 %v344, 64
    %v347 = vpop.permute.xlu0 %346
    %v349 = vadd.f32 %v297, %v347
    %v350 = vtanh.pop %v349
    %v351 = vsub.f32 %v289, %v350
    %353 = vrot.lane.b32.xlu0 %v351, 96
    %v354 = vpop.permute.xlu0 %353
    %v356 = vmul.f32 %v339, %v354
    %358 = vrot.lane.b32.xlu0 %v356, 32
    %v359 = vpop.permute.xlu0 %358
    %v361 = vadd.f32 %v350, %v359
    %363 = vrot.lane.b32.xlu0 %v361, 64
    %v364 = vpop.permute.xlu0 %363
    %s366 = scalar_lea.vmem [#allocation3], 16
    %367 = vst.msk [vmem:[%s366] sm:$0xff] %vm153, %v364
    %s368 = scalar_lea.vmem [#allocation2], 24
    %v369 = vld [vmem:[%s368] sm:$0xff]
    %v370 = vsel %vm153, %v364, 0
    %372 = vmatpush.msra.mxu0 0.0
    %373 = vmatpush.msra.mxu0 0.0
    %374 = vmatpush.msra.mxu0 0.0
    %375 = vmatpush.msra.mxu0 0.0
    %376 = vmatpush.msra.mxu0 0.0
    %377 = vmatpush.msra.mxu0 0.0
    %378 = vmatpush.msra.mxu0 0.0
    %379 = vmatpush.msra.mxu0 0.0
    %380 = vmatpush.msra.mxu0 0.0
    %381 = vmatpush.msra.mxu0 0.0
    %382 = vmatpush.msra.mxu0 0.0
    %383 = vmatpush.msra.mxu0 0.0
    %384 = vmatpush.msra.mxu0 %v147
    %385 = vmatpush.msra.mxu0 %v146
    %386 = vmatpush.msra.mxu0 %v145
    %387 = vmatpush.msra.mxu0 %v144
    %388 = vmatmul.f32.gmra.mxu0 %v370
    %v389 = vpop.f32.mrf.mxu0
    %v390 = vadd.f32 %v151, %v389
    %391 = vdwg.mxu0
    %v392 = vadd.f32 %v369, %v390
    %v393 = vxor.u32 %v392, 2147483648
    %v394 = vmul.f32 %v393, 1.442695
    %v395 = vpow.pop %v394
    %v396 = vadd.f32 %v395, 1.0
    %v397 = vrcp.pop %v396
    %v398 = vmul.f32 %v396, %v397
    %v399 = vsub.f32 1.0, %v398
    %v400 = vmul.f32 %v397, %v399
    %v401 = vadd.f32 %v397, %v400
    %vm402 = vweird.f32 %v396
    %vm403 = vweird.f32 %v397
    %vm404 = vmor %vm402, %vm403
    %v405 = vsel %vm404, %v397, %v401
    %v406 = vand.u32 2147483647, %v396
    %vm407 = vcmp.eq.f32.partialorder %v406, 8.507059e+37
    %v408 = vand.u32 %v396, 2147483648
    %v409 = vor.u32 1.1754944e-38, %v408
    %v410 = vsel %vm407, %v409, %v405
    %v411 = vmul.f32 1.0, %v410
    %413 = vrot.lane.b32.xlu0 %v390, 64
    %v414 = vpop.permute.xlu0 %413
    %v416 = vmul.f32 %v411, %v414
    %418 = vrot.lane.b32.xlu0 %v416, 64
    %v419 = vpop.permute.xlu0 %418
    %v421 = vadd.f32 %v369, %v419
    %v422 = vtanh.pop %v421
    %v423 = vsub.f32 %v361, %v422
    %425 = vrot.lane.b32.xlu0 %v423, 96
    %v426 = vpop.permute.xlu0 %425
    %v428 = vmul.f32 %v411, %v426
    %430 = vrot.lane.b32.xlu0 %v428, 32
    %v431 = vpop.permute.xlu0 %430
    %v433 = vadd.f32 %v422, %v431
    %435 = vrot.lane.b32.xlu0 %v433, 64
    %v436 = vpop.permute.xlu0 %435
    %s438 = scalar_lea.vmem [#allocation3], 24
    %439 = vst.msk [vmem:[%s438] sm:$0xff] %vm153, %v436
    %s440 = scalar_lea.vmem [#allocation2], 32
    %v441 = vld [vmem:[%s440] sm:$0xff]
    %v442 = vsel %vm153, %v436, 0
    %444 = vmatpush.msra.mxu0 0.0
    %445 = vmatpush.msra.mxu0 0.0
    %446 = vmatpush.msra.mxu0 0.0
    %447 = vmatpush.msra.mxu0 0.0
    %448 = vmatpush.msra.mxu0 0.0
    %449 = vmatpush.msra.mxu0 0.0
    %450 = vmatpush.msra.mxu0 0.0
    %451 = vmatpush.msra.mxu0 0.0
    %452 = vmatpush.msra.mxu0 0.0
    %453 = vmatpush.msra.mxu0 0.0
    %454 = vmatpush.msra.mxu0 0.0
    %455 = vmatpush.msra.mxu0 0.0
    %456 = vmatpush.msra.mxu0 %v147
    %457 = vmatpush.msra.mxu0 %v146
    %458 = vmatpush.msra.mxu0 %v145
    %459 = vmatpush.msra.mxu0 %v144
    %460 = vmatmul.f32.gmra.mxu0 %v442
    %v461 = vpop.f32.mrf.mxu0
    %v462 = vadd.f32 %v151, %v461
    %463 = vdwg.mxu0
    %v464 = vadd.f32 %v441, %v462
    %v465 = vxor.u32 %v464, 2147483648
    %v466 = vmul.f32 %v465, 1.442695
    %v467 = vpow.pop %v466
    %v468 = vadd.f32 %v467, 1.0
    %v469 = vrcp.pop %v468
    %v470 = vmul.f32 %v468, %v469
    %v471 = vsub.f32 1.0, %v470
    %v472 = vmul.f32 %v469, %v471
    %v473 = vadd.f32 %v469, %v472
    %vm474 = vweird.f32 %v468
    %vm475 = vweird.f32 %v469
    %vm476 = vmor %vm474, %vm475
    %v477 = vsel %vm476, %v469, %v473
    %v478 = vand.u32 2147483647, %v468
    %vm479 = vcmp.eq.f32.partialorder %v478, 8.507059e+37
    %v480 = vand.u32 %v468, 2147483648
    %v481 = vor.u32 1.1754944e-38, %v480
    %v482 = vsel %vm479, %v481, %v477
    %v483 = vmul.f32 1.0, %v482
    %485 = vrot.lane.b32.xlu0 %v462, 64
    %v486 = vpop.permute.xlu0 %485
    %v488 = vmul.f32 %v483, %v486
    %490 = vrot.lane.b32.xlu0 %v488, 64
    %v491 = vpop.permute.xlu0 %490
    %v493 = vadd.f32 %v441, %v491
    %v494 = vtanh.pop %v493
    %v495 = vsub.f32 %v433, %v494
    %497 = vrot.lane.b32.xlu0 %v495, 96
    %v498 = vpop.permute.xlu0 %497
    %v500 = vmul.f32 %v483, %v498
    %502 = vrot.lane.b32.xlu0 %v500, 32
    %v503 = vpop.permute.xlu0 %502
    %v505 = vadd.f32 %v494, %v503
    %507 = vrot.lane.b32.xlu0 %v505, 64
    %v508 = vpop.permute.xlu0 %507
    %s510 = scalar_lea.vmem [#allocation3], 32
    %511 = vst.msk [vmem:[%s510] sm:$0xff] %vm153, %v508
    %s512 = scalar_lea.vmem [#allocation2], 40
    %v513 = vld [vmem:[%s512] sm:$0xff]
    %v514 = vsel %vm153, %v508, 0
    %516 = vmatpush.msra.mxu0 0.0
    %517 = vmatpush.msra.mxu0 0.0
    %518 = vmatpush.msra.mxu0 0.0
    %519 = vmatpush.msra.mxu0 0.0
    %520 = vmatpush.msra.mxu0 0.0
    %521 = vmatpush.msra.mxu0 0.0
    %522 = vmatpush.msra.mxu0 0.0
    %523 = vmatpush.msra.mxu0 0.0
    %524 = vmatpush.msra.mxu0 0.0
    %525 = vmatpush.msra.mxu0 0.0
    %526 = vmatpush.msra.mxu0 0.0
    %527 = vmatpush.msra.mxu0 0.0
    %528 = vmatpush.msra.mxu0 %v147
    %529 = vmatpush.msra.mxu0 %v146
    %530 = vmatpush.msra.mxu0 %v145
    %531 = vmatpush.msra.mxu0 %v144
    %532 = vmatmul.f32.gmra.mxu0 %v514
    %v533 = vpop.f32.mrf.mxu0
    %v534 = vadd.f32 %v151, %v533
    %535 = vdwg.mxu0
    %v536 = vadd.f32 %v513, %v534
    %v537 = vxor.u32 %v536, 2147483648
    %v538 = vmul.f32 %v537, 1.442695
    %v539 = vpow.pop %v538
    %v540 = vadd.f32 %v539, 1.0
    %v541 = vrcp.pop %v540
    %v542 = vmul.f32 %v540, %v541
    %v543 = vsub.f32 1.0, %v542
    %v544 = vmul.f32 %v541, %v543
    %v545 = vadd.f32 %v541, %v544
    %vm546 = vweird.f32 %v540
    %vm547 = vweird.f32 %v541
    %vm548 = vmor %vm546, %vm547
    %v549 = vsel %vm548, %v541, %v545
    %v550 = vand.u32 2147483647, %v540
    %vm551 = vcmp.eq.f32.partialorder %v550, 8.507059e+37
    %v552 = vand.u32 %v540, 2147483648
    %v553 = vor.u32 1.1754944e-38, %v552
    %v554 = vsel %vm551, %v553, %v549
    %v555 = vmul.f32 1.0, %v554
    %557 = vrot.lane.b32.xlu0 %v534, 64
    %v558 = vpop.permute.xlu0 %557
    %v560 = vmul.f32 %v555, %v558
    %562 = vrot.lane.b32.xlu0 %v560, 64
    %v563 = vpop.permute.xlu0 %562
    %v565 = vadd.f32 %v513, %v563
    %v566 = vtanh.pop %v565
    %v567 = vsub.f32 %v505, %v566
    %569 = vrot.lane.b32.xlu0 %v567, 96
    %v570 = vpop.permute.xlu0 %569
    %v572 = vmul.f32 %v555, %v570
    %574 = vrot.lane.b32.xlu0 %v572, 32
    %v575 = vpop.permute.xlu0 %574
    %v577 = vadd.f32 %v566, %v575
    %579 = vrot.lane.b32.xlu0 %v577, 64
    %v580 = vpop.permute.xlu0 %579
    %s582 = scalar_lea.vmem [#allocation3], 40
    %583 = vst.msk [vmem:[%s582] sm:$0xff] %vm153, %v580
    %s584 = scalar_lea.vmem [#allocation2], 48
    %v585 = vld [vmem:[%s584] sm:$0xff]
    %v586 = vsel %vm153, %v580, 0
    %588 = vmatpush.msra.mxu0 0.0
    %589 = vmatpush.msra.mxu0 0.0
    %590 = vmatpush.msra.mxu0 0.0
    %591 = vmatpush.msra.mxu0 0.0
    %592 = vmatpush.msra.mxu0 0.0
    %593 = vmatpush.msra.mxu0 0.0
    %594 = vmatpush.msra.mxu0 0.0
    %595 = vmatpush.msra.mxu0 0.0
    %596 = vmatpush.msra.mxu0 0.0
    %597 = vmatpush.msra.mxu0 0.0
    %598 = vmatpush.msra.mxu0 0.0
    %599 = vmatpush.msra.mxu0 0.0
    %600 = vmatpush.msra.mxu0 %v147
    %601 = vmatpush.msra.mxu0 %v146
    %602 = vmatpush.msra.mxu0 %v145
    %603 = vmatpush.msra.mxu0 %v144
    %604 = vmatmul.f32.gmra.mxu0 %v586
    %v605 = vpop.f32.mrf.mxu0
    %v606 = vadd.f32 %v151, %v605
    %607 = vdwg.mxu0
    %v608 = vadd.f32 %v585, %v606
    %v609 = vxor.u32 %v608, 2147483648
    %v610 = vmul.f32 %v609, 1.442695
    %v611 = vpow.pop %v610
    %v612 = vadd.f32 %v611, 1.0
    %v613 = vrcp.pop %v612
    %v614 = vmul.f32 %v612, %v613
    %v615 = vsub.f32 1.0, %v614
    %v616 = vmul.f32 %v613, %v615
    %v617 = vadd.f32 %v613, %v616
    %vm618 = vweird.f32 %v612
    %vm619 = vweird.f32 %v613
    %vm620 = vmor %vm618, %vm619
    %v621 = vsel %vm620, %v613, %v617
    %v622 = vand.u32 2147483647, %v612
    %vm623 = vcmp.eq.f32.partialorder %v622, 8.507059e+37
    %v624 = vand.u32 %v612, 2147483648
    %v625 = vor.u32 1.1754944e-38, %v624
    %v626 = vsel %vm623, %v625, %v621
    %v627 = vmul.f32 1.0, %v626
    %629 = vrot.lane.b32.xlu0 %v606, 64
    %v630 = vpop.permute.xlu0 %629
    %v632 = vmul.f32 %v627, %v630
    %634 = vrot.lane.b32.xlu0 %v632, 64
    %v635 = vpop.permute.xlu0 %634
    %v637 = vadd.f32 %v585, %v635
    %v638 = vtanh.pop %v637
    %v639 = vsub.f32 %v577, %v638
    %641 = vrot.lane.b32.xlu0 %v639, 96
    %v642 = vpop.permute.xlu0 %641
    %v644 = vmul.f32 %v627, %v642
    %646 = vrot.lane.b32.xlu0 %v644, 32
    %v647 = vpop.permute.xlu0 %646
    %v649 = vadd.f32 %v638, %v647
    %651 = vrot.lane.b32.xlu0 %v649, 64
    %v652 = vpop.permute.xlu0 %651
    %s654 = scalar_lea.vmem [#allocation3], 48
    %655 = vst.msk [vmem:[%s654] sm:$0xff] %vm153, %v652
    %s656 = scalar_lea.vmem [#allocation2], 56
    %v657 = vld [vmem:[%s656] sm:$0xff]
    %v658 = vsel %vm153, %v652, 0
    %660 = vmatpush.msra.mxu0 0.0
    %661 = vmatpush.msra.mxu0 0.0
    %662 = vmatpush.msra.mxu0 0.0
    %663 = vmatpush.msra.mxu0 0.0
    %664 = vmatpush.msra.mxu0 0.0
    %665 = vmatpush.msra.mxu0 0.0
    %666 = vmatpush.msra.mxu0 0.0
    %667 = vmatpush.msra.mxu0 0.0
    %668 = vmatpush.msra.mxu0 0.0
    %669 = vmatpush.msra.mxu0 0.0
    %670 = vmatpush.msra.mxu0 0.0
    %671 = vmatpush.msra.mxu0 0.0
    %672 = vmatpush.msra.mxu0 %v147
    %673 = vmatpush.msra.mxu0 %v146
    %674 = vmatpush.msra.mxu0 %v145
    %675 = vmatpush.msra.mxu0 %v144
    %676 = vmatmul.f32.gmra.mxu0 %v658
    %v677 = vpop.f32.mrf.mxu0
    %v678 = vadd.f32 %v151, %v677
    %679 = vdwg.mxu0
    %v680 = vadd.f32 %v657, %v678
    %v681 = vxor.u32 %v680, 2147483648
    %v682 = vmul.f32 %v681, 1.442695
    %v683 = vpow.pop %v682
    %v684 = vadd.f32 %v683, 1.0
    %v685 = vrcp.pop %v684
    %v686 = vmul.f32 %v684, %v685
    %v687 = vsub.f32 1.0, %v686
    %v688 = vmul.f32 %v685, %v687
    %v689 = vadd.f32 %v685, %v688
    %vm690 = vweird.f32 %v684
    %vm691 = vweird.f32 %v685
    %vm692 = vmor %vm690, %vm691
    %v693 = vsel %vm692, %v685, %v689
    %v694 = vand.u32 2147483647, %v684
    %vm695 = vcmp.eq.f32.partialorder %v694, 8.507059e+37
    %v696 = vand.u32 %v684, 2147483648
    %v697 = vor.u32 1.1754944e-38, %v696
    %v698 = vsel %vm695, %v697, %v693
    %v699 = vmul.f32 1.0, %v698
    %701 = vrot.lane.b32.xlu0 %v678, 64
    %v702 = vpop.permute.xlu0 %701
    %v704 = vmul.f32 %v699, %v702
    %706 = vrot.lane.b32.xlu0 %v704, 64
    %v707 = vpop.permute.xlu0 %706
    %v709 = vadd.f32 %v657, %v707
    %v710 = vtanh.pop %v709
    %v711 = vsub.f32 %v649, %v710
    %713 = vrot.lane.b32.xlu0 %v711, 96
    %v714 = vpop.permute.xlu0 %713
    %v716 = vmul.f32 %v699, %v714
    %718 = vrot.lane.b32.xlu0 %v716, 32
    %v719 = vpop.permute.xlu0 %718
    %v721 = vadd.f32 %v710, %v719
    %723 = vrot.lane.b32.xlu0 %v721, 64
    %v724 = vpop.permute.xlu0 %723
    %s726 = scalar_lea.vmem [#allocation3], 56
    %727 = vst.msk [vmem:[%s726] sm:$0xff] %vm153, %v724
    %v728 = vld [vmem:[#allocation3] sm:$0xff]
    %v729 = vld [vmem:[#allocation3 + $0x8] sm:$0xff]
    %v730 = vld [vmem:[#allocation3 + $0x10] sm:$0xff]
    %v731 = vld [vmem:[#allocation3 + $0x18] sm:$0xff]
    %v732 = vld [vmem:[#allocation3 + $0x20] sm:$0xff]
    %v733 = vld [vmem:[#allocation3 + $0x28] sm:$0xff]
    %v734 = vld [vmem:[#allocation3 + $0x30] sm:$0xff]
    %v735 = vld [vmem:[#allocation3 + $0x38] sm:$0xff]
    %v736 = vld [vmem:[%s5] sm:$0xff]
    %v737 = vld [vmem:[%s5 + $0x8] sm:$0xff]
    %v738 = vld [vmem:[%s5 + $0x10] sm:$0xff]
    %v739 = vld [vmem:[%s5 + $0x18] sm:$0xff]
    %v740 = vld [vmem:[%s6] sm:$0x1]
    %v742 = vperm.slane %v740, 0
    %v745 = vsel %vm153, %v728, 0
    %v748 = vsel %vm153, %v729, 0
    %v751 = vsel %vm153, %v730, 0
    %v754 = vsel %vm153, %v731, 0
    %v757 = vsel %vm153, %v732, 0
    %v760 = vsel %vm153, %v733, 0
    %v763 = vsel %vm153, %v734, 0
    %v766 = vsel %vm153, %v735, 0
    %768 = vmatpush.msra.mxu0 0.0
    %769 = vmatpush.msra.mxu0 0.0
    %770 = vmatpush.msra.mxu0 0.0
    %771 = vmatpush.msra.mxu0 0.0
    %772 = vmatpush.msra.mxu0 0.0
    %773 = vmatpush.msra.mxu0 0.0
    %774 = vmatpush.msra.mxu0 0.0
    %775 = vmatpush.msra.mxu0 0.0
    %776 = vmatpush.msra.mxu0 0.0
    %777 = vmatpush.msra.mxu0 0.0
    %778 = vmatpush.msra.mxu0 0.0
    %779 = vmatpush.msra.mxu0 0.0
    %780 = vmatpush.msra.mxu0 %v739
    %781 = vmatpush.msra.mxu0 %v738
    %782 = vmatpush.msra.mxu0 %v737
    %783 = vmatpush.msra.mxu0 %v736
    %784 = vmatmul.f32.gmra.mxu0 %v745
    %v785 = vpop.f32.mrf.mxu0
    %v786 = vadd.f32 %v742, %v785
    %787 = vmatmul.f32.gmra.mxu0 %v748
    %v788 = vpop.f32.mrf.mxu0
    %v789 = vadd.f32 %v742, %v788
    %790 = vmatmul.f32.gmra.mxu0 %v751
    %v791 = vpop.f32.mrf.mxu0
    %v792 = vadd.f32 %v742, %v791
    %793 = vmatmul.f32.gmra.mxu0 %v754
    %v794 = vpop.f32.mrf.mxu0
    %v795 = vadd.f32 %v742, %v794
    %796 = vmatmul.f32.gmra.mxu0 %v757
    %v797 = vpop.f32.mrf.mxu0
    %v798 = vadd.f32 %v742, %v797
    %799 = vmatmul.f32.gmra.mxu0 %v760
    %v800 = vpop.f32.mrf.mxu0
    %v801 = vadd.f32 %v742, %v800
    %802 = vmatmul.f32.gmra.mxu0 %v763
    %v803 = vpop.f32.mrf.mxu0
    %v804 = vadd.f32 %v742, %v803
    %805 = vmatmul.f32.gmra.mxu0 %v766
    %v806 = vpop.f32.mrf.mxu0
    %v807 = vadd.f32 %v742, %v806
    %808 = vdwg.mxu0
    %vm809 = vcmask 31744
    %810 = vst.msk [vmem:[%s7] sm:$0xff] %vm809, %v786
    %811 = vst.msk [vmem:[%s7 + $0x8] sm:$0xff] %vm809, %v789
    %812 = vst.msk [vmem:[%s7 + $0x10] sm:$0xff] %vm809, %v792
    %813 = vst.msk [vmem:[%s7 + $0x18] sm:$0xff] %vm809, %v795
    %814 = vst.msk [vmem:[%s7 + $0x20] sm:$0xff] %vm809, %v798
    %815 = vst.msk [vmem:[%s7 + $0x28] sm:$0xff] %vm809, %v801
    %816 = vst.msk [vmem:[%s7 + $0x30] sm:$0xff] %vm809, %v804
    %817 = vst.msk [vmem:[%s7 + $0x38] sm:$0xff] %vm809, %v807
    // Predicated region
    $region38: #{tpu_custom_call.1} parent=1 // pred_check
      _
    $region39: #{tpu_custom_call.1} parent=1 // pred_check_branch
      %819 = sbr.rel (0) target = $region41
    $region40: #{tpu_custom_call.1} parent=1 // pred_region
      _
    $region41: #{tpu_custom_call.1} parent=1 // pred_fallthru
      _
    // Predicated region
    $region42: #{tpu_custom_call.1} parent=1 // pred_check
      _
    $region43: #{tpu_custom_call.1} parent=1 // pred_check_branch
      %821 = sbr.rel (0) target = $region45
    $region44: #{tpu_custom_call.1} parent=1 // pred_region
      _
    $region45: #{tpu_custom_call.1} parent=1 // pred_fallthru
      _
    %822 = vsyncpa [#allocation5], 1
    %823 = vsyncpa [#allocation7], 1

</llo_original>
